<compile_context>
chip_gen: v6e
topology: v6e:2x2x1
jax: 0.10.0
libtpu: 0.0.40
codegen_flags: <defaults>
</compile_context>

<pallas_src>
import functools

import jax
import jax.numpy as jnp
from jax.experimental import pallas as pl
from jax.experimental.pallas import tpu as pltpu


def _round_up(x, m):
    return ((x + m - 1) // m) * m


def _triplet_loss_kernel(a_ref, p_ref, n_ref, out_ref, acc_ref, *,
                         margin, size_average, batch_true, tile_rows,
                         needs_mask):
    i = pl.program_id(0)

    @pl.when(i == 0)
    def _init():
        acc_ref[...] = jnp.zeros_like(acc_ref)

    a = a_ref[...].astype(jnp.float32)
    p = p_ref[...].astype(jnp.float32)
    n = n_ref[...].astype(jnp.float32)

    diff_pos = a - p
    diff_neg = a - n

    # Fused single cross-lane (XLU) reduction:
    #   sum(dp^2 - dn^2, axis=1) == dist_pos - dist_neg  (exactly).
    d = diff_pos * diff_pos - diff_neg * diff_neg
    per_row = jnp.sum(d, axis=1, keepdims=True)                 # (TB, 1)
    losses = jnp.maximum(per_row + jnp.float32(margin), 0.0)    # relu

    if needs_mask:
        # Rows beyond the true batch (the unspecified tail of a partial last
        # tile) must not contribute: relu(garbage + margin) would otherwise
        # leak into the sum.
        row = jax.lax.broadcasted_iota(jnp.int32, losses.shape, 0)
        valid = (row + i * tile_rows) < batch_true
        losses = jnp.where(valid, losses, 0.0)

    acc_ref[...] += jnp.sum(losses, axis=0, keepdims=True)      # (1, 1)

    @pl.when(i == pl.num_programs(0) - 1)
    def _finalize():
        total = jnp.sum(acc_ref[...])
        if size_average:
            total = total * jnp.float32(1.0 / batch_true)
        out_ref[0, 0] = total


def triplet_loss(anchor, positive, negative, margin, size_average=True,
                 tile_rows=None):
    """Triplet loss via a batch-tiled, pipelined Pallas TPU kernel."""
    assert anchor.shape == positive.shape == negative.shape
    assert anchor.ndim == 2
    B, D = anchor.shape
    itemsize = jnp.dtype(anchor.dtype).itemsize

    if tile_rows is None:
        # Largest batch tile whose double-buffered working set
        # (3 inputs x 2 pipeline buffers x TB x D x itemsize) stays within
        # ~16 MiB: safe on v5e/v6e (128 MiB VMEM) and v7x (64 MiB VMEM),
        # while being large enough to amortize the ~0.35 us per-step overhead.
        tile_budget = 16 * 1024 * 1024
        max_tb = max(8, tile_budget // (3 * 2 * max(D, 1) * itemsize))
        tb = min(4096, (max_tb // 8) * 8)
    else:
        tb = int(tile_rows)
    tb = max(8, min(tb, _round_up(B, 8)))
    assert tb % 8 == 0

    grid = (pl.cdiv(B, tb),)
    needs_mask = (B % tb) != 0

    kernel = functools.partial(
        _triplet_loss_kernel,
        margin=float(margin),
        size_average=bool(size_average),
        batch_true=B,
        tile_rows=tb,
        needs_mask=needs_mask,
    )

    in_spec = pl.BlockSpec((tb, D), lambda i: (i, 0))

    # TODO(synk): for D << 128 a lane-dense (D, B) transposed layout would use
    # the lanes better; kept feature-on-lanes layout for generality.
    out = pl.pallas_call(
        kernel,
        out_shape=jax.ShapeDtypeStruct((1, 1), jnp.float32),
        grid_spec=pltpu.PrefetchScalarGridSpec(
            num_scalar_prefetch=0,
            grid=grid,
            in_specs=[in_spec, in_spec, in_spec],
            out_specs=pl.BlockSpec(memory_space=pltpu.SMEM),
            scratch_shapes=[pltpu.VMEM((1, 1), jnp.float32)],
        ),
        compiler_params=pltpu.CompilerParams(
            dimension_semantics=("arbitrary",),   # reduction over batch tiles
            vmem_limit_bytes=40 * 1024 * 1024,
        ),
        cost_estimate=pl.CostEstimate(
            flops=7 * B * D,
            transcendentals=0,
            bytes_accessed=3 * B * D * itemsize + 4,
        ),
    )(anchor, positive, negative)

    return out[0, 0]


def triplet_loss_reference(anchor, positive, negative, margin, size_average=True):
    dp = jnp.sum((anchor - positive) ** 2, axis=1)
    dn = jnp.sum((anchor - negative) ** 2, axis=1)
    losses = jax.nn.relu(dp - dn + margin)
    return jnp.mean(losses) if size_average else jnp.sum(losses)


def _make_triplet(key, B, D):
    k_a, k_p, k_n, key = jax.random.split(key, 4)
    a = jax.random.normal(k_a, (B, D), dtype=jnp.float32)
    p = jax.random.normal(k_p, (B, D), dtype=jnp.float32)
    n = jax.random.normal(k_n, (B, D), dtype=jnp.float32)
    return a, p, n, key


if __name__ == "__main__":
    key = jax.random.PRNGKey(0)
    margin = 1.0

    # Case 1: small even batch, mean reduction (single tile).
    a, p, n, key = _make_triplet(key, 8, 32)
    loss = triplet_loss(a, p, n, margin, size_average=True)
    jax.block_until_ready(loss)
    ref = triplet_loss_reference(a, p, n, margin, size_average=True)
    assert jnp.allclose(loss, ref, rtol=1e-5, atol=1e-5), (loss, ref)

    # Case 2: uneven batch (partial tile tail is masked in-kernel), sum.
    a, p, n, key = _make_triplet(key, 13, 32)
    loss = triplet_loss(a, p, n, margin, size_average=False)
    jax.block_until_ready(loss)
    ref = triplet_loss_reference(a, p, n, margin, size_average=False)
    assert jnp.allclose(loss, ref, rtol=1e-5, atol=1e-5), (loss, ref)

    # Case 3: multi-tile grid (tile override), divisible batch, mean.
    a, p, n, key = _make_triplet(key, 32, 32)
    loss = triplet_loss(a, p, n, margin, size_average=True, tile_rows=8)
    jax.block_until_ready(loss)
    ref = triplet_loss_reference(a, p, n, margin, size_average=True)
    assert jnp.allclose(loss, ref, rtol=1e-5, atol=1e-5), (loss, ref)

    # Case 4: multi-tile grid with a partial last tile, sum.
    a, p, n, key = _make_triplet(key, 29, 32)
    loss = triplet_loss(a, p, n, margin, size_average=False, tile_rows=8)
    jax.block_until_ready(loss)
    ref = triplet_loss_reference(a, p, n, margin, size_average=False)
    assert jnp.allclose(loss, ref, rtol=1e-5, atol=1e-5), (loss, ref)

    print("KERNEL_OK")
</pallas_src>

<mosaic_0001>
module attributes {stable_mosaic.version = 11 : i64} {
  func.func @_triplet_loss_kernel(%arg0: i32, %arg1: memref<8x32xf32, #tpu.memory_space<vmem>>, %arg2: memref<8x32xf32, #tpu.memory_space<vmem>>, %arg3: memref<8x32xf32, #tpu.memory_space<vmem>>, %arg4: memref<1x1xf32, #tpu.memory_space<smem>>, %arg5: memref<1x1xf32, #tpu.memory_space<vmem>>) attributes {dimension_semantics = [#tpu.dimension_semantics<arbitrary>], iteration_bounds = array<i64: 1>, scalar_prefetch = 0 : i64, scratch_operands = 1 : i64, tpu.core_type = #tpu.core_type<tc>, window_params = [{transform_indices = @transform_0, window_bounds = array<i64: 8, 32>}, {transform_indices = @transform_1, window_bounds = array<i64: 8, 32>}, {transform_indices = @transform_2, window_bounds = array<i64: 8, 32>}, {transform_indices = @transform_3, window_bounds = array<i64: 1, 1>}]} {
    %c0_i32 = arith.constant 0 : i32
    %0 = arith.cmpi eq, %arg0, %c0_i32 : i32
    %1 = arith.extui %0 : i1 to i32
    %c0_i32_0 = arith.constant 0 : i32
    %2 = arith.cmpi ne, %1, %c0_i32_0 : i32
    scf.if %2 {
      %cst_15 = arith.constant 0.000000e+00 : f32
      %25 = vector.broadcast %cst_15 : f32 to vector<1x1xf32>
      %c0_16 = arith.constant 0 : index
      %c0_17 = arith.constant 0 : index
      %26 = vector.load %arg5[%c0_16, %c0_17] : memref<1x1xf32, #tpu.memory_space<vmem>>, vector<1x1xf32>
      tpu.vector_store %arg5[%c0_16, %c0_17], %25 {strides = array<i32>} : memref<1x1xf32, #tpu.memory_space<vmem>>, vector<1x1xf32>,
    } else {
    }
    %c0 = arith.constant 0 : index
    %c0_1 = arith.constant 0 : index
    %3 = vector.load %arg1[%c0, %c0_1] : memref<8x32xf32, #tpu.memory_space<vmem>>, vector<8x32xf32>
    %c0_2 = arith.constant 0 : index
    %c0_3 = arith.constant 0 : index
    %4 = vector.load %arg2[%c0_2, %c0_3] : memref<8x32xf32, #tpu.memory_space<vmem>>, vector<8x32xf32>
    %c0_4 = arith.constant 0 : index
    %c0_5 = arith.constant 0 : index
    %5 = vector.load %arg3[%c0_4, %c0_5] : memref<8x32xf32, #tpu.memory_space<vmem>>, vector<8x32xf32>
    %6 = arith.subf %3, %4 : vector<8x32xf32>
    %7 = arith.subf %3, %5 : vector<8x32xf32>
    %8 = arith.mulf %6, %6 : vector<8x32xf32>
    %9 = arith.mulf %7, %7 : vector<8x32xf32>
    %10 = arith.subf %8, %9 : vector<8x32xf32>
    %cst = arith.constant dense<0.000000e+00> : vector<8xf32>
    %11 = vector.multi_reduction <add>, %10, %cst [1] : vector<8x32xf32> to vector<8xf32>
    %12 = vector.shape_cast %11 : vector<8xf32> to vector<8x1xf32>
    %cst_6 = arith.constant 1.000000e+00 : f32
    %13 = vector.broadcast %cst_6 : f32 to vector<8x1xf32>
    %14 = arith.addf %12, %13 : vector<8x1xf32>
    %cst_7 = arith.constant 0.000000e+00 : f32
    %15 = vector.broadcast %cst_7 : f32 to vector<8x1xf32>
    %16 = arith.maximumf %14, %15 : vector<8x1xf32>
    %c0_8 = arith.constant 0 : index
    %c0_9 = arith.constant 0 : index
    %17 = vector.load %arg5[%c0_8, %c0_9] : memref<1x1xf32, #tpu.memory_space<vmem>>, vector<1x1xf32>
    %cst_10 = arith.constant dense<0.000000e+00> : vector<1xf32>
    %18 = vector.multi_reduction <add>, %16, %cst_10 [0] : vector<8x1xf32> to vector<1xf32>
    %19 = vector.shape_cast %18 : vector<1xf32> to vector<1x1xf32>
    %20 = arith.addf %17, %19 : vector<1x1xf32>
    %c0_11 = arith.constant 0 : index
    %c0_12 = arith.constant 0 : index
    %21 = vector.load %arg5[%c0_11, %c0_12] : memref<1x1xf32, #tpu.memory_space<vmem>>, vector<1x1xf32>
    tpu.vector_store %arg5[%c0_11, %c0_12], %20 {strides = array<i32>} : memref<1x1xf32, #tpu.memory_space<vmem>>, vector<1x1xf32>,
    %c0_i32_13 = arith.constant 0 : i32
    %22 = arith.cmpi eq, %arg0, %c0_i32_13 : i32
    %23 = arith.extui %22 : i1 to i32
    %c0_i32_14 = arith.constant 0 : i32
    %24 = arith.cmpi ne, %23, %c0_i32_14 : i32
    scf.if %24 {
      %c0_15 = arith.constant 0 : index
      %c0_16 = arith.constant 0 : index
      %25 = vector.load %arg5[%c0_15, %c0_16] : memref<1x1xf32, #tpu.memory_space<vmem>>, vector<1x1xf32>
      %26 = vector.shape_cast %25 : vector<1x1xf32> to vector<1x1x1xf32>
      %cst_17 = arith.constant dense<0.000000e+00> : vector<1xf32>
      %27 = vector.multi_reduction <add>, %26, %cst_17 [1, 2] : vector<1x1x1xf32> to vector<1xf32>
      %28 = vector.shape_cast %27 : vector<1xf32> to vector<1x1x1xf32>
      %29 = vector.extract %28[0, 0, 0] : f32 from vector<1x1x1xf32>
      %cst_18 = arith.constant 1.250000e-01 : f32
      %30 = arith.mulf %29, %cst_18 : f32
      %c0_19 = arith.constant 0 : index
      %c0_20 = arith.constant 0 : index
      %31 = memref.load %arg4[%c0_19, %c0_20] : memref<1x1xf32, #tpu.memory_space<smem>>
      memref.store %30, %arg4[%c0_19, %c0_20] : memref<1x1xf32, #tpu.memory_space<smem>>
    } else {
    }
    return
  }
  func.func @transform_0(%arg0: i32) -> (i32, i32) {
    %c0_i32 = arith.constant 0 : i32
    %c0_i32_0 = arith.constant 0 : i32
    return %arg0, %c0_i32 : i32, i32
  }
  func.func @transform_1(%arg0: i32) -> (i32, i32) {
    %c0_i32 = arith.constant 0 : i32
    %c0_i32_0 = arith.constant 0 : i32
    return %arg0, %c0_i32 : i32, i32
  }
  func.func @transform_2(%arg0: i32) -> (i32, i32) {
    %c0_i32 = arith.constant 0 : i32
    %c0_i32_0 = arith.constant 0 : i32
    return %arg0, %c0_i32 : i32, i32
  }
  func.func @transform_3(%arg0: i32) -> (i32, i32) {
    %c0_i32 = arith.constant 0 : i32
    %c0_i32_0 = arith.constant 0 : i32
    %c0_i32_1 = arith.constant 0 : i32
    return %c0_i32, %c0_i32_0 : i32, i32
  }
}

</mosaic_0001>

<llo_original>
// kernel: tpu_custom_call.1
$region0: #{tpu_custom_call.1}
  #allocation0 [shape = 'u32[]', space=smem, size = 0x4, offset = 0x4, fixed_abs, tag = 'smem constant byte address 0x4 - core index']
  #allocation1 [shape = 'u32[144,128]{1,0:T(1,128)}', space=vmem, size = 0x12000, scoped, tag = 'internal scratch']
  #allocation2 [shape = 'f32[1,1]{1,0:T(1,128)}', space=vmem, size = 0x200, scoped, tag = 'scratch operand']
  %s0 = inlined_call_operand.hbm [shape: f32[8,32], index: 0, kind: input, shape index: {}]
  %s1 = inlined_call_operand.hbm [shape: f32[8,32], index: 1, kind: input, shape index: {}]
  %s2 = inlined_call_operand.hbm [shape: f32[8,32], index: 2, kind: input, shape index: {}]
  %s3 = inlined_call_operand.hbm [shape: f32[1,1], index: 3, kind: output, shape index: {}]
  %s4 = sld [smem:[#allocation0]]
  $region42: #{tpu_custom_call.1} parent=0
    _
  %s6 = ssub.s32 1, %s4
  %s7 = scalar_select 0, %s6, %s4
  $region1: #{tpu_custom_call.1} parent=0
    #allocation3 [shape = 'u8[4096]{0}', space=vmem, size = 0x1000, scoped, tag = 'input window, operand 0, single buffered']
    #allocation4 [shape = 's32[1]{0}', space=sflag, size = 0x4, scoped, tag = 'scoped memory for tpu_custom_call.1']
    #allocation5 [shape = 's32[1]{0}', space=sflag, size = 0x4, scoped, tag = 'scoped memory for tpu_custom_call.1']
    #allocation6 [shape = 'u8[4096]{0}', space=vmem, size = 0x1000, scoped, tag = 'input window, operand 1, single buffered']
    #allocation7 [shape = 's32[1]{0}', space=sflag, size = 0x4, scoped, tag = 'scoped memory for tpu_custom_call.1']
    #allocation8 [shape = 'u8[4096]{0}', space=vmem, size = 0x1000, scoped, tag = 'input window, operand 2, single buffered']
    #allocation9 [shape = 'u8[512]{0}', space=smem, size = 0x200, scoped, tag = 'output window, operand 0, single buffered']
    %8 = vsyncpa [#allocation4], 0
    %9 = vsyncpa [#allocation7], 0
    %10 = vsyncpa [#allocation5], 0
    // Predicated region
    $region2: #{tpu_custom_call.1} parent=1 // pred_check
      _
    $region3: #{tpu_custom_call.1} parent=1 // pred_check_branch
      %12 = sbr.rel (0) target = $region5
    $region4: #{tpu_custom_call.1} parent=1 // pred_region
      %s14 = ssub.s32 128, 128
      %15 = vsyncadd [#allocation4], %s14
      %s17 = sshll.u32 [#allocation3], 4
      %s18 = int_to_ptr.vmem [resolvable:$true] %s17
      %20 = dma.hbm_to_vmem [thread:$0]  %s0, 128, %s18, [#allocation4]
    $region5: #{tpu_custom_call.1} parent=1 // pred_fallthru
      _
    // Predicated region
    $region6: #{tpu_custom_call.1} parent=1 // pred_check
      _
    $region7: #{tpu_custom_call.1} parent=1 // pred_check_branch
      %22 = sbr.rel (0) target = $region9
    $region8: #{tpu_custom_call.1} parent=1 // pred_region
      %s24 = ssub.s32 128, 128
      %25 = vsyncadd [#allocation7], %s24
      %s27 = sshll.u32 [#allocation6], 4
      %s28 = int_to_ptr.vmem [resolvable:$true] %s27
      %30 = dma.hbm_to_vmem [thread:$0]  %s1, 128, %s28, [#allocation7]
    $region9: #{tpu_custom_call.1} parent=1 // pred_fallthru
      _
    // Predicated region
    $region10: #{tpu_custom_call.1} parent=1 // pred_check
      _
    $region11: #{tpu_custom_call.1} parent=1 // pred_check_branch
      %32 = sbr.rel (0) target = $region13
    $region12: #{tpu_custom_call.1} parent=1 // pred_region
      %s34 = ssub.s32 128, 128
      %35 = vsyncadd [#allocation7], %s34
      %s37 = sshll.u32 [#allocation8], 4
      %s38 = int_to_ptr.vmem [resolvable:$true] %s37
      %40 = dma.hbm_to_vmem [thread:$0]  %s2, 128, %s38, [#allocation7]
    $region13: #{tpu_custom_call.1} parent=1 // pred_fallthru
      _
    // Predicated region
    $region14: #{tpu_custom_call.1} parent=1 // pred_check
      _
    $region15: #{tpu_custom_call.1} parent=1 // pred_check_branch
      %42 = sbr.rel (0) target = $region17
    $region16: #{tpu_custom_call.1} parent=1 // pred_region
      %43 = dma.done [#allocation4], 128
    $region17: #{tpu_custom_call.1} parent=1 // pred_fallthru
      _
    // Predicated region
    $region18: #{tpu_custom_call.1} parent=1 // pred_check
      _
    $region19: #{tpu_custom_call.1} parent=1 // pred_check_branch
      %45 = sbr.rel (0) target = $region21
    $region20: #{tpu_custom_call.1} parent=1 // pred_region
      %46 = dma.done [#allocation7], 128
    $region21: #{tpu_custom_call.1} parent=1 // pred_fallthru
      _
    // Predicated region
    $region22: #{tpu_custom_call.1} parent=1 // pred_check
      _
    $region23: #{tpu_custom_call.1} parent=1 // pred_check_branch
      %48 = sbr.rel (0) target = $region25
    $region24: #{tpu_custom_call.1} parent=1 // pred_region
      %49 = dma.done [#allocation7], 128
    $region25: #{tpu_custom_call.1} parent=1 // pred_fallthru
      _
    %p50 = scmp.eq.s32.totalorder 0, 0
    // Predicated region
    $region26: #{tpu_custom_call.1} parent=1 // pred_check
      %p51 = pneg %p50
    $region27: #{tpu_custom_call.1} parent=1 // pred_check_branch
      %53 = sbr.rel (%p51) target = $region29
    $region28: #{tpu_custom_call.1} parent=1 // pred_region
      %vm54 = vcmask 0
      %55 = vst.msk [vmem:[#allocation2] sm:$0x1] %vm54, 0.0
    $region29: #{tpu_custom_call.1} parent=1 // pred_fallthru
      _
    %v56 = vld [vmem:[#allocation3] sm:$0xff]
    %v57 = vld [vmem:[#allocation6] sm:$0xff]
    %v58 = vld [vmem:[#allocation8] sm:$0xff]
    %v59 = vsub.f32 %v56, %v57
    %v60 = vsub.f32 %v56, %v58
    %v61 = vmul.f32 %v59, %v59
    %v62 = vmul.f32 %v60, %v60
    %v63 = vsub.f32 %v61, %v62
    %vm64 = vcmask 261120
    %v65 = vsel %vm64, %v63, 0.0
    %66 = vadd.xlane.f32.xlu0 %v65
    %v67 = vpop.xlane.xlu0 %66
    %v68 = vadd.f32 %v67, 1.0
    %v69 = vmax.f32 %v68, 0.0
    %v70 = vld [vmem:[#allocation2] sm:$0x1]
    %v71 = vrot.slane %v69, 4
    %v72 = vadd.f32 %v69, %v71
    %v73 = vrot.slane %v72, 2
    %v74 = vadd.f32 %v72, %v73
    %v75 = vrot.slane %v74, 1
    %v76 = vadd.f32 %v74, %v75
    %v77 = vadd.f32 %v70, %v76
    %vm78 = vcmask 0
    %79 = vst.msk [vmem:[#allocation2] sm:$0x1] %vm78, %v77
    // Predicated region
    $region30: #{tpu_custom_call.1} parent=1 // pred_check
      %p80 = pneg %p50
    $region31: #{tpu_custom_call.1} parent=1 // pred_check_branch
      %82 = sbr.rel (%p80) target = $region33
    $region32: #{tpu_custom_call.1} parent=1 // pred_region
      %v83 = vld [vmem:[#allocation2] sm:$0x1]
      %v84 = vadd.f32 %v83, 0.0
      %s85 = vtos %v84
      %s86 = smul.f32 %s85, 0.125
      %s87 = scalar_lea.smem [#allocation9], 0
      %88 = sst [smem:[%s87]] %s86
    $region33: #{tpu_custom_call.1} parent=1 // pred_fallthru
      _
    // Predicated region
    $region34: #{tpu_custom_call.1} parent=1 // pred_check
      _
    $region35: #{tpu_custom_call.1} parent=1 // pred_check_branch
      %90 = sbr.rel (0) target = $region37
    $region36: #{tpu_custom_call.1} parent=1 // pred_region
      %s92 = ssub.s32 16, 16
      %93 = vsyncadd [#allocation5], %s92
      %96 = dma.smem_to_hbm [#allocation9], 16, %s3, [#allocation5]
    $region37: #{tpu_custom_call.1} parent=1 // pred_fallthru
      _
    // Predicated region
    $region38: #{tpu_custom_call.1} parent=1 // pred_check
      _
    $region39: #{tpu_custom_call.1} parent=1 // pred_check_branch
      %98 = sbr.rel (0) target = $region41
    $region40: #{tpu_custom_call.1} parent=1 // pred_region
      %99 = dma.done [#allocation5], 16
    $region41: #{tpu_custom_call.1} parent=1 // pred_fallthru
      _
    %100 = sfence
    %101 = vsyncpa [#allocation4], 1
    %102 = vsyncpa [#allocation7], 1
    %103 = vsyncpa [#allocation5], 1

</llo_original>
